<compile_context>
chip_gen: v6e
topology: v6e:2x2x1
jax: 0.10.0
libtpu: 0.0.40
codegen_flags: <defaults>
</compile_context>

<pallas_src>
import functools
import math

import jax
import jax.numpy as jnp
from jax.experimental import pallas as pl
from jax.experimental.pallas import tpu as pltpu


# ---------------------------------------------------------------------------
# Helpers
# ---------------------------------------------------------------------------

def _fit_tile(dim, target, align):
    """Largest tile <= target that divides `dim` and is a multiple of `align`.
    Falls back to the full dimension (always a legal Pallas block)."""
    if dim <= target:
        return dim
    for t in range(target, 0, -1):
        if dim % t == 0 and t % align == 0:
            return t
    return dim


def _head_grouping(embed_dim, head_dim):
    """Lane-aligned head grouping: returns (heads_per_block, n_groups, group_width)
    when E is a multiple of 128 (so per-group BlockSpec slices are legal), else None."""
    if embed_dim % 128 == 0:
        gw = (head_dim * 128) // math.gcd(head_dim, 128)  # lcm(head_dim, 128) | E
        return gw // head_dim, embed_dim // gw, gw
    return None


# ---------------------------------------------------------------------------
# Tiled linear kernel: y = x @ W + b, optional fused ReLU
# ---------------------------------------------------------------------------

def _linear_kernel(x_ref, w_ref, b_ref, o_ref, acc_ref, *, activation):
    @pl.when(pl.program_id(2) == 0)
    def _init():
        acc_ref[...] = jnp.zeros_like(acc_ref)

    acc_ref[...] += jnp.dot(x_ref[...], w_ref[...],
                            preferred_element_type=jnp.float32)

    @pl.when(pl.program_id(2) == pl.num_programs(2) - 1)
    def _finalize():
        y = acc_ref[...] + b_ref[...].astype(jnp.float32)   # bias added exactly once
        if activation == "relu":
            y = jnp.maximum(y, 0.0)
        o_ref[...] = y.astype(o_ref.dtype)


def pallas_linear(x, w_t, b, *, activation=None, tm=256, tn=512, tk=512):
    """x: (..., K) @ w_t: (K, N) + b: (N,) -> (..., N). Rows are flattened so the
    grid has many steps (pipelining / megacore balance)."""
    orig_shape = x.shape
    K = orig_shape[-1]
    N = w_t.shape[1]
    M = x.size // K
    x2 = x.reshape(M, K)
    tm = _fit_tile(M, tm, 8)
    tn = _fit_tile(N, tn, 128)
    tk = _fit_tile(K, tk, 128)
    out = pl.pallas_call(
        functools.partial(_linear_kernel, activation=activation),
        out_shape=jax.ShapeDtypeStruct((M, N), x.dtype),
        grid=(M // tm, N // tn, K // tk),
        in_specs=[
            pl.BlockSpec((tm, tk), lambda i, j, k: (i, k)),
            pl.BlockSpec((tk, tn), lambda i, j, k: (k, j)),
            pl.BlockSpec((1, tn), lambda i, j, k: (0, j)),
        ],
        out_specs=pl.BlockSpec((tm, tn), lambda i, j, k: (i, j)),
        scratch_shapes=[pltpu.VMEM((tm, tn), jnp.float32)],
        compiler_params=pltpu.CompilerParams(
            dimension_semantics=("parallel", "parallel", "arbitrary")),
        cost_estimate=pl.CostEstimate(
            flops=2 * M * N * K, transcendentals=0,
            bytes_accessed=4 * (M * K + K * N + M * N)),
    )(x2, w_t, b.reshape(1, N))
    return out.reshape(*orig_shape[:-1], N)


# ---------------------------------------------------------------------------
# Attention kernel (per batch element / head-group, transpose-free head split)
# ---------------------------------------------------------------------------

def _mha_kernel(*refs, q_loc, k_loc, v_loc, heads_per_block, head_dim, scale):
    # refs = (*input_refs, o_ref); q/k/v are addressed by (ref_index, col_offset)
    # inside their VMEM blocks, so fused QKV / KV slabs need no XLA slicing.
    # TODO(synk): KV-tiled online-softmax (flash) formulation for long sequences.
    o_ref = refs[-1]
    vals = [r[...] for r in refs[:-1]]

    def head(loc, h):
        ridx, col = loc
        start = col + h * head_dim
        return vals[ridx][:, start:start + head_dim]

    for h in range(heads_per_block):
        qh = head(q_loc, h)
        kh = head(k_loc, h)
        vh = head(v_loc, h)
        # q @ k^T via dot_general contracting the last dims (no materialized k.T).
        scores = jax.lax.dot_general(
            qh, kh, (((1,), (1,)), ((), ())),
            preferred_element_type=jnp.float32) * scale
        m = jnp.max(scores, axis=-1, keepdims=True)
        p = jnp.exp(scores - m)
        denom = jnp.sum(p, axis=-1, keepdims=True)
        attn = p * pl.reciprocal(denom, approx=True)       # EUP, frees VALU slots
        ctx = jnp.dot(attn.astype(vh.dtype), vh,
                      preferred_element_type=jnp.float32)
        o_ref[:, h * head_dim:(h + 1) * head_dim] = ctx.astype(o_ref.dtype)


def _attention_call(operands, in_specs, out_shape, out_spec, grid, sem,
                    q_loc, k_loc, v_loc, heads_per_block, head_dim):
    kernel = functools.partial(
        _mha_kernel, q_loc=q_loc, k_loc=k_loc, v_loc=v_loc,
        heads_per_block=heads_per_block, head_dim=head_dim,
        scale=1.0 / math.sqrt(head_dim))
    return pl.pallas_call(
        kernel,
        out_shape=out_shape,
        grid=grid,
        in_specs=in_specs,
        out_specs=out_spec,
        compiler_params=pltpu.CompilerParams(dimension_semantics=sem),
    )(*operands)


def pallas_self_attention(qkv, num_heads, head_dim):
    """qkv: (B, S, 3E) fused projection -> context (B, S, E). No transposes."""
    B, S, three_e = qkv.shape
    E = num_heads * head_dim
    grouping = _head_grouping(E, head_dim)
    if grouping is not None:
        G, n_groups, gw = grouping
        in_specs = [
            pl.BlockSpec((None, S, gw), lambda b, hg: (b, 0, hg)),               # q
            pl.BlockSpec((None, S, gw), lambda b, hg: (b, 0, n_groups + hg)),    # k
            pl.BlockSpec((None, S, gw), lambda b, hg: (b, 0, 2 * n_groups + hg)),# v
        ]
        out_spec = pl.BlockSpec((None, S, gw), lambda b, hg: (b, 0, hg))
        return _attention_call(
            (qkv, qkv, qkv), in_specs,
            jax.ShapeDtypeStruct((B, S, E), qkv.dtype), out_spec,
            grid=(B, n_groups), sem=("parallel", "parallel"),
            q_loc=(0, 0), k_loc=(1, 0), v_loc=(2, 0),
            heads_per_block=G, head_dim=head_dim)
    # Small-E fallback: one (S, 3E) slab per batch element; split q/k/v + heads in-kernel.
    in_specs = [pl.BlockSpec((None, S, three_e), lambda b: (b, 0, 0))]
    out_spec = pl.BlockSpec((None, S, E), lambda b: (b, 0, 0))
    return _attention_call(
        (qkv,), in_specs,
        jax.ShapeDtypeStruct((B, S, E), qkv.dtype), out_spec,
        grid=(B,), sem=("parallel",),
        q_loc=(0, 0), k_loc=(0, E), v_loc=(0, 2 * E),
        heads_per_block=num_heads, head_dim=head_dim)


def pallas_cross_attention(q, kv, num_heads, head_dim):
    """q: (B, Sq, E), kv: (B, Skv, 2E) fused K|V -> context (B, Sq, E)."""
    B, Sq, E = q.shape
    _, Skv, two_e = kv.shape
    grouping = _head_grouping(E, head_dim)
    if grouping is not None:
        G, n_groups, gw = grouping
        in_specs = [
            pl.BlockSpec((None, Sq, gw), lambda b, hg: (b, 0, hg)),              # q
            pl.BlockSpec((None, Skv, gw), lambda b, hg: (b, 0, hg)),             # k
            pl.BlockSpec((None, Skv, gw), lambda b, hg: (b, 0, n_groups + hg)),  # v
        ]
        out_spec = pl.BlockSpec((None, Sq, gw), lambda b, hg: (b, 0, hg))
        return _attention_call(
            (q, kv, kv), in_specs,
            jax.ShapeDtypeStruct((B, Sq, E), q.dtype), out_spec,
            grid=(B, n_groups), sem=("parallel", "parallel"),
            q_loc=(0, 0), k_loc=(1, 0), v_loc=(2, 0),
            heads_per_block=G, head_dim=head_dim)
    in_specs = [
        pl.BlockSpec((None, Sq, E), lambda b: (b, 0, 0)),
        pl.BlockSpec((None, Skv, two_e), lambda b: (b, 0, 0)),
    ]
    out_spec = pl.BlockSpec((None, Sq, E), lambda b: (b, 0, 0))
    return _attention_call(
        (q, kv), in_specs,
        jax.ShapeDtypeStruct((B, Sq, E), q.dtype), out_spec,
        grid=(B,), sem=("parallel",),
        q_loc=(0, 0), k_loc=(1, 0), v_loc=(1, E),
        heads_per_block=num_heads, head_dim=head_dim)


# ---------------------------------------------------------------------------
# Fused residual-add + LayerNorm kernel
# ---------------------------------------------------------------------------

def _add_layernorm_kernel(x_ref, r_ref, g_ref, b_ref, o_ref, *, eps):
    x = x_ref[...].astype(jnp.float32) + r_ref[...].astype(jnp.float32)
    mean = jnp.mean(x, axis=-1, keepdims=True)
    xc = x - mean
    var = jnp.mean(xc * xc, axis=-1, keepdims=True)
    y = xc * jax.lax.rsqrt(var + eps) * g_ref[...] + b_ref[...]
    o_ref[...] = y.astype(o_ref.dtype)


def pallas_add_layernorm(x, residual, gamma, beta, eps=1e-5, tm=256):
    orig_shape = x.shape
    E = orig_shape[-1]
    M = x.size // E
    tm = _fit_tile(M, tm, 8)
    out = pl.pallas_call(
        functools.partial(_add_layernorm_kernel, eps=eps),
        out_shape=jax.ShapeDtypeStruct((M, E), x.dtype),
        grid=(M // tm,),
        in_specs=[
            pl.BlockSpec((tm, E), lambda i: (i, 0)),
            pl.BlockSpec((tm, E), lambda i: (i, 0)),
            pl.BlockSpec((1, E), lambda i: (0, 0)),
            pl.BlockSpec((1, E), lambda i: (0, 0)),
        ],
        out_specs=pl.BlockSpec((tm, E), lambda i: (i, 0)),
        compiler_params=pltpu.CompilerParams(dimension_semantics=("parallel",)),
    )(x.reshape(M, E), residual.reshape(M, E), gamma.reshape(1, E), beta.reshape(1, E))
    return out.reshape(orig_shape)


# ---------------------------------------------------------------------------
# Decoder layer module
# ---------------------------------------------------------------------------

class TransformerDecoderLayerPallas:
    def __init__(self, embed_dim, num_heads, ff_dim, dropout=0.1, *, key):
        assert embed_dim % num_heads == 0
        self.embed_dim = embed_dim
        self.num_heads = num_heads
        self.head_dim = embed_dim // num_heads
        self.ff_dim = ff_dim
        # TODO(synk): dropout is a no-op here (inference / model.eval() semantics).
        self.dropout = dropout

        ks = jax.random.split(key, 20)
        E, F = embed_dim, ff_dim
        bound_e = 1.0 / math.sqrt(E)
        bound_f = 1.0 / math.sqrt(F)

        def u(k, shape, bound):
            return jax.random.uniform(k, shape, jnp.float32, minval=-bound, maxval=bound)

        # Self-attention: fused QKV (q|k|v along output axis) + output projection.
        self.sa_qkv_w = u(ks[0], (E, 3 * E), bound_e)
        self.sa_qkv_b = u(ks[1], (3 * E,), bound_e)
        self.sa_out_w = u(ks[2], (E, E), bound_e)
        self.sa_out_b = u(ks[3], (E,), bound_e)
        # Cross-attention: Q from tgt, fused KV (k|v) from memory, output projection.
        self.ca_q_w = u(ks[4], (E, E), bound_e)
        self.ca_q_b = u(ks[5], (E,), bound_e)
        self.ca_kv_w = u(ks[6], (E, 2 * E), bound_e)
        self.ca_kv_b = u(ks[7], (2 * E,), bound_e)
        self.ca_out_w = u(ks[8], (E, E), bound_e)
        self.ca_out_b = u(ks[9], (E,), bound_e)
        # Feed-forward.
        self.ff_w1 = u(ks[10], (E, F), bound_e)
        self.ff_b1 = u(ks[11], (F,), bound_e)
        self.ff_w2 = u(ks[12], (F, E), bound_f)
        self.ff_b2 = u(ks[13], (E,), bound_f)
        # LayerNorm affine params (randomized for a stronger correctness check).
        self.ln1_g = 1.0 + 0.1 * jax.random.normal(ks[14], (E,), jnp.float32)
        self.ln1_b = 0.1 * jax.random.normal(ks[15], (E,), jnp.float32)
        self.ln2_g = 1.0 + 0.1 * jax.random.normal(ks[16], (E,), jnp.float32)
        self.ln2_b = 0.1 * jax.random.normal(ks[17], (E,), jnp.float32)
        self.ln3_g = 1.0 + 0.1 * jax.random.normal(ks[18], (E,), jnp.float32)
        self.ln3_b = 0.1 * jax.random.normal(ks[19], (E,), jnp.float32)

    def __call__(self, tgt, memory, tgt_mask=None, memory_mask=None):
        # TODO(synk): tgt_mask / memory_mask (masked_fill(-inf)) not implemented; None only.
        assert tgt_mask is None and memory_mask is None
        H, Dh = self.num_heads, self.head_dim

        # --- self-attention block ---
        qkv = pallas_linear(tgt, self.sa_qkv_w, self.sa_qkv_b)            # (B, St, 3E)
        ctx = pallas_self_attention(qkv, H, Dh)                           # (B, St, E)
        sa_out = pallas_linear(ctx, self.sa_out_w, self.sa_out_b)
        tgt = pallas_add_layernorm(tgt, sa_out, self.ln1_g, self.ln1_b)   # residual + norm1

        # --- cross-attention block ---
        q = pallas_linear(tgt, self.ca_q_w, self.ca_q_b)                  # (B, St, E)
        kv = pallas_linear(memory, self.ca_kv_w, self.ca_kv_b)            # (B, Sm, 2E)
        ctx = pallas_cross_attention(q, kv, H, Dh)                        # (B, St, E)
        ca_out = pallas_linear(ctx, self.ca_out_w, self.ca_out_b)
        tgt = pallas_add_layernorm(tgt, ca_out, self.ln2_g, self.ln2_b)   # residual + norm2

        # --- feed-forward block (ReLU fused into first matmul finalize) ---
        h = pallas_linear(tgt, self.ff_w1, self.ff_b1, activation="relu")
        ff_out = pallas_linear(h, self.ff_w2, self.ff_b2)
        tgt = pallas_add_layernorm(tgt, ff_out, self.ln3_g, self.ln3_b)   # residual + norm3
        return tgt


# ---------------------------------------------------------------------------
# Pure-JAX reference (mirrors the PyTorch module, eval mode, mask=None)
# ---------------------------------------------------------------------------

def reference_decoder_layer(layer, tgt, memory):
    E, H, Dh = layer.embed_dim, layer.num_heads, layer.head_dim

    def linear(x, w, b):
        return x @ w + b

    def mha(q_in, kv_in, qw, qb, kw, kb, vw, vb, ow, ob):
        B, Sq, _ = q_in.shape
        Skv = kv_in.shape[1]
        q = linear(q_in, qw, qb).reshape(B, Sq, H, Dh).transpose(0, 2, 1, 3)
        k = linear(kv_in, kw, kb).reshape(B, Skv, H, Dh).transpose(0, 2, 1, 3)
        v = linear(kv_in, vw, vb).reshape(B, Skv, H, Dh).transpose(0, 2, 1, 3)
        s = jnp.einsum("bhqd,bhkd->bhqk", q, k) / math.sqrt(Dh)
        a = jax.nn.softmax(s, axis=-1)
        c = jnp.einsum("bhqk,bhkd->bhqd", a, v)
        c = c.transpose(0, 2, 1, 3).reshape(B, Sq, E)
        return linear(c, ow, ob)

    def ln(x, g, b, eps=1e-5):
        m = x.mean(-1, keepdims=True)
        v = ((x - m) ** 2).mean(-1, keepdims=True)
        return (x - m) / jnp.sqrt(v + eps) * g + b

    sa = mha(tgt, tgt,
             layer.sa_qkv_w[:, :E], layer.sa_qkv_b[:E],
             layer.sa_qkv_w[:, E:2 * E], layer.sa_qkv_b[E:2 * E],
             layer.sa_qkv_w[:, 2 * E:], layer.sa_qkv_b[2 * E:],
             layer.sa_out_w, layer.sa_out_b)
    x = ln(tgt + sa, layer.ln1_g, layer.ln1_b)

    ca = mha(x, memory,
             layer.ca_q_w, layer.ca_q_b,
             layer.ca_kv_w[:, :E], layer.ca_kv_b[:E],
             layer.ca_kv_w[:, E:], layer.ca_kv_b[E:],
             layer.ca_out_w, layer.ca_out_b)
    x = ln(x + ca, layer.ln2_g, layer.ln2_b)

    h = jax.nn.relu(linear(x, layer.ff_w1, layer.ff_b1))
    ff = linear(h, layer.ff_w2, layer.ff_b2)
    return ln(x + ff, layer.ln3_g, layer.ln3_b)


if __name__ == "__main__":
    embed_dim, num_heads, ff_dim = 32, 4, 64
    batch, seq_tgt, seq_mem = 2, 8, 16

    root = jax.random.PRNGKey(0)
    k_params, k_tgt, k_mem = jax.random.split(root, 3)

    layer = TransformerDecoderLayerPallas(embed_dim, num_heads, ff_dim, key=k_params)

    tgt = jax.random.normal(k_tgt, (batch, seq_tgt, embed_dim), jnp.float32)
    memory = jax.random.normal(k_mem, (batch, seq_mem, embed_dim), jnp.float32)

    out = layer(tgt, memory)
    out = jax.block_until_ready(out)

    ref = reference_decoder_layer(layer, tgt, memory)
    assert out.shape == (batch, seq_tgt, embed_dim)
    max_err = jnp.max(jnp.abs(out - ref))
    assert jnp.allclose(out, ref, atol=2e-3, rtol=2e-3), f"mismatch vs reference: {max_err}"

    print("KERNEL_OK")
</pallas_src>

<mosaic_0001>
module attributes {stable_mosaic.version = 11 : i64} {
  func.func @_linear_kernel(%arg0: i32, %arg1: i32, %arg2: i32, %arg3: memref<16x32xf32, #tpu.memory_space<vmem>>, %arg4: memref<32x96xf32, #tpu.memory_space<vmem>>, %arg5: memref<1x96xf32, #tpu.memory_space<vmem>>, %arg6: memref<16x96xf32, #tpu.memory_space<vmem>>, %arg7: memref<16x96xf32, #tpu.memory_space<vmem>>) attributes {dimension_semantics = [#tpu.dimension_semantics<parallel>, #tpu.dimension_semantics<parallel>, #tpu.dimension_semantics<arbitrary>], iteration_bounds = array<i64: 1, 1, 1>, scalar_prefetch = 0 : i64, scratch_operands = 1 : i64, tpu.core_type = #tpu.core_type<tc>, window_params = [{transform_indices = @transform_0, window_bounds = array<i64: 16, 32>}, {transform_indices = @transform_1, window_bounds = array<i64: 32, 96>}, {transform_indices = @transform_2, window_bounds = array<i64: 1, 96>}, {transform_indices = @transform_3, window_bounds = array<i64: 16, 96>}]} {
    %c0_i32 = arith.constant 0 : i32
    %0 = arith.cmpi eq, %arg2, %c0_i32 : i32
    %1 = arith.extui %0 : i1 to i32
    %c0_i32_0 = arith.constant 0 : i32
    %2 = arith.cmpi ne, %1, %c0_i32_0 : i32
    scf.if %2 {
      %cst_10 = arith.constant 0.000000e+00 : f32
      %12 = vector.broadcast %cst_10 : f32 to vector<16x96xf32>
      %c0_11 = arith.constant 0 : index
      %c0_12 = arith.constant 0 : index
      %13 = vector.load %arg7[%c0_11, %c0_12] : memref<16x96xf32, #tpu.memory_space<vmem>>, vector<16x96xf32>
      tpu.vector_store %arg7[%c0_11, %c0_12], %12 {strides = array<i32>} : memref<16x96xf32, #tpu.memory_space<vmem>>, vector<16x96xf32>,
    } else {
    }
    %c0 = arith.constant 0 : index
    %c0_1 = arith.constant 0 : index
    %3 = vector.load %arg7[%c0, %c0_1] : memref<16x96xf32, #tpu.memory_space<vmem>>, vector<16x96xf32>
    %c0_2 = arith.constant 0 : index
    %c0_3 = arith.constant 0 : index
    %4 = vector.load %arg3[%c0_2, %c0_3] : memref<16x32xf32, #tpu.memory_space<vmem>>, vector<16x32xf32>
    %c0_4 = arith.constant 0 : index
    %c0_5 = arith.constant 0 : index
    %5 = vector.load %arg4[%c0_4, %c0_5] : memref<32x96xf32, #tpu.memory_space<vmem>>, vector<32x96xf32>
    %cst = arith.constant dense<0.000000e+00> : vector<16x96xf32>
    %6 = tpu.matmul %4, %5, %cst {dimension_numbers = #tpu.dot_dimension_numbers<[1], [0], [0], [1], [0, 0, 1, 1], [], []>} : vector<16x32xf32>, vector<32x96xf32>, vector<16x96xf32> -> vector<16x96xf32>
    %7 = arith.addf %3, %6 : vector<16x96xf32>
    %c0_6 = arith.constant 0 : index
    %c0_7 = arith.constant 0 : index
    %8 = vector.load %arg7[%c0_6, %c0_7] : memref<16x96xf32, #tpu.memory_space<vmem>>, vector<16x96xf32>
    tpu.vector_store %arg7[%c0_6, %c0_7], %7 {strides = array<i32>} : memref<16x96xf32, #tpu.memory_space<vmem>>, vector<16x96xf32>,
    %c0_i32_8 = arith.constant 0 : i32
    %9 = arith.cmpi eq, %arg2, %c0_i32_8 : i32
    %10 = arith.extui %9 : i1 to i32
    %c0_i32_9 = arith.constant 0 : i32
    %11 = arith.cmpi ne, %10, %c0_i32_9 : i32
    scf.if %11 {
      %c0_10 = arith.constant 0 : index
      %c0_11 = arith.constant 0 : index
      %12 = vector.load %arg7[%c0_10, %c0_11] : memref<16x96xf32, #tpu.memory_space<vmem>>, vector<16x96xf32>
      %c0_12 = arith.constant 0 : index
      %c0_13 = arith.constant 0 : index
      %13 = vector.load %arg5[%c0_12, %c0_13] : memref<1x96xf32, #tpu.memory_space<vmem>>, vector<1x96xf32>
      %14 = vector.broadcast %13 : vector<1x96xf32> to vector<16x96xf32>
      %15 = arith.addf %12, %14 : vector<16x96xf32>
      %c0_14 = arith.constant 0 : index
      %c0_15 = arith.constant 0 : index
      %16 = vector.load %arg6[%c0_14, %c0_15] : memref<16x96xf32, #tpu.memory_space<vmem>>, vector<16x96xf32>
      tpu.vector_store %arg6[%c0_14, %c0_15], %15 {strides = array<i32>} : memref<16x96xf32, #tpu.memory_space<vmem>>, vector<16x96xf32>,
    } else {
    }
    return
  }
  func.func @transform_0(%arg0: i32, %arg1: i32, %arg2: i32) -> (i32, i32) {
    %c0_i32 = arith.constant 0 : i32
    return %arg0, %arg2 : i32, i32
  }
  func.func @transform_1(%arg0: i32, %arg1: i32, %arg2: i32) -> (i32, i32) {
    %c0_i32 = arith.constant 0 : i32
    return %arg2, %arg1 : i32, i32
  }
  func.func @transform_2(%arg0: i32, %arg1: i32, %arg2: i32) -> (i32, i32) {
    %c0_i32 = arith.constant 0 : i32
    %c0_i32_0 = arith.constant 0 : i32
    return %c0_i32, %arg1 : i32, i32
  }
  func.func @transform_3(%arg0: i32, %arg1: i32, %arg2: i32) -> (i32, i32) {
    %c0_i32 = arith.constant 0 : i32
    return %arg0, %arg1 : i32, i32
  }
}

</mosaic_0001>

<llo_original>
// kernel: tpu_custom_call.1
$region0: #{tpu_custom_call.1}
  #allocation0 [shape = 'u32[]', space=smem, size = 0x4, offset = 0x4, fixed_abs, tag = 'smem constant byte address 0x4 - core index']
  #allocation1 [shape = 'u32[144,128]{1,0:T(1,128)}', space=vmem, size = 0x12000, scoped, tag = 'internal scratch']
  #allocation2 [shape = 'f32[16,96]{1,0:T(8,128)}', space=vmem, size = 0x2000, scoped, tag = 'scratch operand']
  %s0 = inlined_call_operand.hbm [shape: f32[16,32], index: 0, kind: input, shape index: {}]
  %s1 = inlined_call_operand.hbm [shape: f32[32,96], index: 1, kind: input, shape index: {}]
  %s2 = inlined_call_operand.vmem [shape: f32[1,96], index: 2, kind: input, shape index: {}]
  %s3 = inlined_call_operand.hbm [shape: f32[16,96], index: 3, kind: output, shape index: {}]
  %s4 = sld [smem:[#allocation0]]
  $region38: #{tpu_custom_call.1} parent=0
    _
  %s6 = ssub.s32 1, %s4
  %s7 = scalar_select 0, %s6, %s4
  $region1: #{tpu_custom_call.1} parent=0
    #allocation3 [shape = 'u8[8192]{0}', space=vmem, size = 0x2000, scoped, tag = 'input window, operand 0, single buffered']
    #allocation4 [shape = 's32[1]{0}', space=sflag, size = 0x4, scoped, tag = 'scoped memory for tpu_custom_call.1']
    #allocation5 [shape = 's32[1]{0}', space=sflag, size = 0x4, scoped, tag = 'scoped memory for tpu_custom_call.1']
    #allocation6 [shape = 'u8[16384]{0}', space=vmem, size = 0x4000, scoped, tag = 'input window, operand 1, single buffered']
    #allocation7 [shape = 's32[1]{0}', space=sflag, size = 0x4, scoped, tag = 'scoped memory for tpu_custom_call.1']
    #allocation8 [shape = 'u8[8192]{0}', space=vmem, size = 0x2000, scoped, tag = 'output window, operand 0, single buffered']
    %8 = vsyncpa [#allocation4], 0
    %9 = vsyncpa [#allocation7], 0
    %10 = vsyncpa [#allocation5], 0
    // Predicated region
    $region2: #{tpu_custom_call.1} parent=1 // pred_check
      _
    $region3: #{tpu_custom_call.1} parent=1 // pred_check_branch
      %12 = sbr.rel (0) target = $region5
    $region4: #{tpu_custom_call.1} parent=1 // pred_region
      %s14 = ssub.s32 256, 256
      %15 = vsyncadd [#allocation4], %s14
      %s16 = sshll.u32 [#allocation3], 4
      %s17 = int_to_ptr.vmem [resolvable:$true] %s16
      %22 = dma.hbm_to_vmem [thread:$0]  %s0, 256, %s17, [#allocation4], 128, 128, 8
    $region5: #{tpu_custom_call.1} parent=1 // pred_fallthru
      _
    // Predicated region
    $region6: #{tpu_custom_call.1} parent=1 // pred_check
      _
    $region7: #{tpu_custom_call.1} parent=1 // pred_check_branch
      %24 = sbr.rel (0) target = $region9
    $region8: #{tpu_custom_call.1} parent=1 // pred_region
      %s26 = ssub.s32 512, 512
      %27 = vsyncadd [#allocation7], %s26
      %s28 = sshll.u32 [#allocation6], 4
      %s29 = int_to_ptr.vmem [resolvable:$true] %s28
      %34 = dma.hbm_to_vmem [thread:$0]  %s1, 512, %s29, [#allocation7], 128, 128, 8
    $region9: #{tpu_custom_call.1} parent=1 // pred_fallthru
      _
    // Predicated region
    $region10: #{tpu_custom_call.1} parent=1 // pred_check
      _
    $region11: #{tpu_custom_call.1} parent=1 // pred_check_branch
      %36 = sbr.rel (0) target = $region13
    $region12: #{tpu_custom_call.1} parent=1 // pred_region
      _
    $region13: #{tpu_custom_call.1} parent=1 // pred_fallthru
      _
    // Predicated region
    $region14: #{tpu_custom_call.1} parent=1 // pred_check
      _
    $region15: #{tpu_custom_call.1} parent=1 // pred_check_branch
      %38 = sbr.rel (0) target = $region17
    $region16: #{tpu_custom_call.1} parent=1 // pred_region
      %39 = dma.done [#allocation4], 256
    $region17: #{tpu_custom_call.1} parent=1 // pred_fallthru
      _
    // Predicated region
    $region18: #{tpu_custom_call.1} parent=1 // pred_check
      _
    $region19: #{tpu_custom_call.1} parent=1 // pred_check_branch
      %41 = sbr.rel (0) target = $region21
    $region20: #{tpu_custom_call.1} parent=1 // pred_region
      %42 = dma.done [#allocation7], 512
    $region21: #{tpu_custom_call.1} parent=1 // pred_fallthru
      _
    %p43 = scmp.eq.s32.totalorder 0, 0
    // Predicated region
    $region22: #{tpu_custom_call.1} parent=1 // pred_check
      %p44 = pneg %p43
    $region23: #{tpu_custom_call.1} parent=1 // pred_check_branch
      %46 = sbr.rel (%p44) target = $region25
    $region24: #{tpu_custom_call.1} parent=1 // pred_region
      %vm47 = vcmask 785408
      %48 = vst.msk [vmem:[#allocation2] sm:$0xff] %vm47, 0.0
      %49 = vst.msk [vmem:[#allocation2 + $0x8] sm:$0xff] %vm47, 0.0
    $region25: #{tpu_custom_call.1} parent=1 // pred_fallthru
      _
    %v50 = vld [vmem:[#allocation2] sm:$0xff]
    %v51 = vld [vmem:[#allocation2 + $0x8] sm:$0xff]
    %v52 = vld [vmem:[#allocation3] sm:$0xff]
    %v53 = vld [vmem:[#allocation3 + $0x8] sm:$0xff]
    %v54 = vld [vmem:[#allocation6] sm:$0xff]
    %v55 = vld [vmem:[#allocation6 + $0x8] sm:$0xff]
    %v56 = vld [vmem:[#allocation6 + $0x10] sm:$0xff]
    %v57 = vld [vmem:[#allocation6 + $0x18] sm:$0xff]
    %vm58 = vcmask 261120
    %v60 = vsel %vm58, %v52, 0
    %v63 = vsel %vm58, %v53, 0
    %65 = vmatprep.subr.mxu0 0.0
    %66 = vmatpush1.msra.mxu0 0.0
    %67 = vmatprep.subr.mxu0 0.0
    %68 = vmatpush1.msra.mxu0 0.0
    %69 = vmatprep.subr.mxu0 0.0
    %70 = vmatpush1.msra.mxu0 0.0
    %71 = vmatprep.subr.mxu0 0.0
    %72 = vmatpush1.msra.mxu0 0.0
    %73 = vmatprep.subr.mxu0 0.0
    %74 = vmatpush1.msra.mxu0 0.0
    %75 = vmatprep.subr.mxu0 0.0
    %76 = vmatpush1.msra.mxu0 0.0
    %77 = vmatprep.subr.mxu0 0.0
    %78 = vmatpush1.msra.mxu0 0.0
    %79 = vmatprep.subr.mxu0 0.0
    %80 = vmatpush1.msra.mxu0 0.0
    %81 = vmatprep.subr.mxu0 0.0
    %82 = vmatpush1.msra.mxu0 0.0
    %83 = vmatprep.subr.mxu0 0.0
    %84 = vmatpush1.msra.mxu0 0.0
    %85 = vmatprep.subr.mxu0 0.0
    %86 = vmatpush1.msra.mxu0 0.0
    %87 = vmatprep.subr.mxu0 0.0
    %88 = vmatpush1.msra.mxu0 0.0
    %89 = vmatprep.subr.mxu0 0.0
    %90 = vmatpush1.msra.mxu0 %v57
    %91 = vmatprep.subr.mxu0 0.0
    %92 = vmatpush1.msra.mxu0 %v56
    %93 = vmatprep.subr.mxu0 0.0
    %94 = vmatpush1.msra.mxu0 %v55
    %95 = vmatprep.subr.mxu0 0.0
    %96 = vmatpush1.msra.mxu0 %v54
    %97 = vmatprep.subr.mxu0 0.0
    %98 = vmatpush2.msra.mxu0 0.0
    %99 = vmatprep.subr.mxu0 0.0
    %100 = vmatpush2.msra.mxu0 0.0
    %101 = vmatprep.subr.mxu0 0.0
    %102 = vmatpush2.msra.mxu0 0.0
    %103 = vmatprep.subr.mxu0 0.0
    %104 = vmatpush2.msra.mxu0 0.0
    %105 = vmatprep.subr.mxu0 0.0
    %106 = vmatpush2.msra.mxu0 0.0
    %107 = vmatprep.subr.mxu0 0.0
    %108 = vmatpush2.msra.mxu0 0.0
    %109 = vmatprep.subr.mxu0 0.0
    %110 = vmatpush2.msra.mxu0 0.0
    %111 = vmatprep.subr.mxu0 0.0
    %112 = vmatpush2.msra.mxu0 0.0
    %113 = vmatprep.subr.mxu0 0.0
    %114 = vmatpush2.msra.mxu0 0.0
    %115 = vmatprep.subr.mxu0 0.0
    %116 = vmatpush2.msra.mxu0 0.0
    %117 = vmatprep.subr.mxu0 0.0
    %118 = vmatpush2.msra.mxu0 0.0
    %119 = vmatprep.subr.mxu0 0.0
    %120 = vmatpush2.msra.mxu0 0.0
    %121 = vmatprep.subr.mxu0 0.0
    %122 = vmatpush2.msra.mxu0 0.0
    %123 = vmatprep.subr.mxu0 0.0
    %124 = vmatpush2.msra.mxu0 0.0
    %125 = vmatprep.subr.mxu0 0.0
    %126 = vmatpush2.msra.mxu0 0.0
    %127 = vmatprep.subr.mxu0 0.0
    %128 = vmatpush2.msra.mxu0 0.0
    %129 = vmatprep.mubr.f32.mxu0 0.0
    %130 = vmatmul.mubr.f32.gmra.mxu0 %v60
    %v131 = vpop.f32.mrf.mxu0
    %v132 = vadd.f32 0.0, %v131
    %v133 = vpop.f32.mrf.mxu0
    %134 = vmatprep.mubr.f32.mxu0 0.0
    %135 = vmatmul.mubr.f32.gmra.mxu0 %v63
    %v136 = vpop.f32.mrf.mxu0
    %v137 = vadd.f32 0.0, %v136
    %v138 = vpop.f32.mrf.mxu0
    %139 = vdwg.mxu0
    %v140 = vadd.f32 %v50, %v132
    %v141 = vadd.f32 %v51, %v137
    %vm142 = vcmask 785408
    %143 = vst.msk [vmem:[#allocation2] sm:$0xff] %vm142, %v140
    %144 = vst.msk [vmem:[#allocation2 + $0x8] sm:$0xff] %vm142, %v141
    // Predicated region
    $region26: #{tpu_custom_call.1} parent=1 // pred_check
      %p145 = pneg %p43
    $region27: #{tpu_custom_call.1} parent=1 // pred_check_branch
      %147 = sbr.rel (%p145) target = $region29
    $region28: #{tpu_custom_call.1} parent=1 // pred_region
      %v148 = vld [vmem:[#allocation2] sm:$0xff]
      %v149 = vld [vmem:[#allocation2 + $0x8] sm:$0xff]
      %v150 = vld [vmem:[%s2] sm:$0x1]
      %v152 = vlaneseq
      %v153 = vshrl.u32 %v152, 7
      %v154 = vsub.s32 0, %v153
      %v155 = vrot.slane %v150, %v154
      %v157 = vadd.f32 %v148, %v155
      %v158 = vadd.f32 %v149, %v155
      %159 = vst.msk [vmem:[#allocation8] sm:$0xff] %vm142, %v157
      %160 = vst.msk [vmem:[#allocation8 + $0x8] sm:$0xff] %vm142, %v158
    $region29: #{tpu_custom_call.1} parent=1 // pred_fallthru
      _
    // Predicated region
    $region30: #{tpu_custom_call.1} parent=1 // pred_check
      _
    $region31: #{tpu_custom_call.1} parent=1 // pred_check_branch
      %162 = sbr.rel (0) target = $region33
    $region32: #{tpu_custom_call.1} parent=1 // pred_region
      %s164 = ssub.s32 256, 256
      %165 = vsyncadd [#allocation5], %s164
      %s166 = sshll.u32 [#allocation8], 4
      %s167 = int_to_ptr.vmem [resolvable:$true] %s166
      %172 = dma.vmem_to_hbm [thread:$0]  %s167, 256, %s3, [#allocation5], 128, 128, 8
    $region33: #{tpu_custom_call.1} parent=1 // pred_fallthru
      _
    // Predicated region
    $region34: #{tpu_custom_call.1} parent=1 // pred_check
      _
    $region35: #{tpu_custom_call.1} parent=1 // pred_check_branch
      %174 = sbr.rel (0) target = $region37
    $region36: #{tpu_custom_call.1} parent=1 // pred_region
      %175 = dma.done [#allocation5], 256
    $region37: #{tpu_custom_call.1} parent=1 // pred_fallthru
      _
    %176 = vsyncpa [#allocation4], 1
    %177 = vsyncpa [#allocation7], 1
    %178 = vsyncpa [#allocation5], 1

</llo_original>
